<compile_context>
chip_gen: v6e
topology: v6e:2x2x1
jax: 0.10.0
libtpu: 0.0.40
codegen_flags: <defaults>
</compile_context>

<pallas_src>
import functools

import jax
import jax.numpy as jnp
from jax.experimental import pallas as pl
from jax.experimental.pallas import tpu as pltpu

ALPHA = 0.95
GAMMA = 2  # hard-coded as (1 - p_t)**2 below

_VMEM_LIMIT_BYTES = 32 * 1024 * 1024   # explicit, v7x-safe scoped-VMEM budget
_VMEM_BUDGET_BYTES = 24 * 1024 * 1024  # headroom for output blocks / compiler scratch


def _round_up(x, m):
    return ((x + m - 1) // m) * m


def _pick_tile_n(n, c, itemsize, *, tile_n_hint):
    """Largest row tile (multiple of 8) whose double-buffered inputs fit VMEM."""
    # 2 input arrays x 2 pipeline buffers x (tile_n, c) in native dtype.
    bytes_per_row = 2 * 2 * c * itemsize
    cap = max(8, (_VMEM_BUDGET_BYTES // max(bytes_per_row, 1)) // 8 * 8)
    tile_n = min(tile_n_hint, cap, _round_up(n, 8))
    return _round_up(max(tile_n, 8), 8)


def _focal_loss_tile_kernel(n_rows, tile_n, x_ref, t_ref, o_ref):
    # x_ref, t_ref : VMEM (tile_n, C) in native dtype (f32 / bf16)
    # o_ref        : VMEM (8, C) f32 -- per-tile partial sum folded onto 8 sublanes
    x = x_ref[...].astype(jnp.float32)
    t = t_ref[...].astype(jnp.float32)

    xt = x * t

    # F.binary_cross_entropy_with_logits(x, t, reduction='none'), stable form:
    #   max(x, 0) - x*t + log(1 + exp(-|x|))
    bce = jnp.maximum(x, 0.0) - xt + jnp.log1p(jnp.exp(-jnp.abs(x)))

    # p_t uses the raw logits, exactly as the torch module does:
    #   p_t = x*t + (1-x)*(1-t)  =>  1 - p_t = x + t - 2*x*t
    one_minus_pt = x + t - 2.0 * xt

    # alpha_t = ALPHA*t + (1-ALPHA)*(1-t), constants folded
    alpha_t = (2.0 * ALPHA - 1.0) * t + (1.0 - ALPHA)

    loss = alpha_t * bce * (one_minus_pt * one_minus_pt)  # gamma == 2

    # Mask rows of the final partial tile that lie beyond N (padded VMEM is
    # undefined).  n_rows / tile_n are compile-time constants.
    row0 = pl.program_id(0) * tile_n
    row_ids = row0 + jax.lax.broadcasted_iota(jnp.int32, loss.shape, 0)
    loss = jnp.where(row_ids < n_rows, loss, 0.0)

    # Fold tile rows onto 8 sublanes with pure VPU adds (sublane axis splits
    # cleanly into (tile_n//8, 8) vreg tiles); the single cross-lane/sublane
    # reduce and the division by (C * num_boxes) are deferred to outside.
    c = loss.shape[1]
    o_ref[...] = jnp.sum(loss.reshape(tile_n // 8, 8, c), axis=0)


def weighted_focal_loss(inputs, targets, num_boxes, *, tile_n=1024):
    """inputs, targets: (N, C) arrays (any float dtype). num_boxes: scalar."""
    n, c = inputs.shape
    tile_n = _pick_tile_n(n, c, jnp.dtype(inputs.dtype).itemsize, tile_n_hint=tile_n)
    num_tiles = pl.cdiv(n, tile_n)

    kernel = functools.partial(_focal_loss_tile_kernel, n, tile_n)

    partials = pl.pallas_call(
        kernel,
        out_shape=jax.ShapeDtypeStruct((num_tiles * 8, c), jnp.float32),
        grid=(num_tiles,),
        in_specs=[
            pl.BlockSpec((tile_n, c), lambda i: (i, 0)),  # logits, native dtype
            pl.BlockSpec((tile_n, c), lambda i: (i, 0)),  # targets, native dtype
        ],
        out_specs=pl.BlockSpec((8, c), lambda i: (i, 0)),  # per-tile partial sums
        compiler_params=pltpu.CompilerParams(
            dimension_semantics=("parallel",),     # megacore-shardable on v7x
            vmem_limit_bytes=_VMEM_LIMIT_BYTES,
        ),
    )(inputs, targets)

    # loss.mean(1).sum() / num_boxes  ==  sum(loss) / (C * num_boxes)
    return jnp.sum(partials) / (jnp.float32(c) * jnp.asarray(num_boxes, jnp.float32))


def _reference(inputs, targets, num_boxes):
    x = inputs.astype(jnp.float32)
    t = targets.astype(jnp.float32)
    bce = jnp.maximum(x, 0.0) - x * t + jnp.log1p(jnp.exp(-jnp.abs(x)))
    p_t = x * t + (1.0 - x) * (1.0 - t)
    loss = bce * (1.0 - p_t) ** GAMMA
    alpha_t = ALPHA * t + (1.0 - ALPHA) * (1.0 - t)
    loss = alpha_t * loss
    return jnp.sum(jnp.mean(loss, axis=1)) / num_boxes


if __name__ == "__main__":
    key = jax.random.PRNGKey(0)
    k1, k2 = jax.random.split(key)

    # Small, forward-consistent shapes: 20 "query" rows x 128 classes.
    # N is deliberately NOT a multiple of the tile so the masked-tail path runs.
    N, C = 20, 128
    inputs = jax.random.normal(k1, (N, C), dtype=jnp.float32)
    targets = (jax.random.uniform(k2, (N, C)) > 0.5).astype(jnp.float32)
    num_boxes = 5.0

    ref = _reference(inputs, targets, num_boxes)

    # Multi-tile path (3 grid steps, last tile masked).
    out = weighted_focal_loss(inputs, targets, num_boxes, tile_n=8)
    out = jax.block_until_ready(out)
    assert jnp.allclose(out, ref, rtol=1e-5, atol=1e-5), (out, ref)

    # Default (auto-tiled, single-tile here) path.
    out2 = weighted_focal_loss(inputs, targets, num_boxes)
    out2 = jax.block_until_ready(out2)
    assert jnp.allclose(out2, ref, rtol=1e-5, atol=1e-5), (out2, ref)

    # bf16 streaming path (native-dtype DMA, f32 math inside the kernel).
    out3 = weighted_focal_loss(
        inputs.astype(jnp.bfloat16), targets.astype(jnp.bfloat16), num_boxes
    )
    out3 = jax.block_until_ready(out3)
    ref_bf16 = _reference(
        inputs.astype(jnp.bfloat16), targets.astype(jnp.bfloat16), num_boxes
    )
    assert jnp.allclose(out3, ref_bf16, rtol=2e-2, atol=2e-2), (out3, ref_bf16)

    print("KERNEL_OK")
</pallas_src>

<mosaic_0001>
module attributes {stable_mosaic.version = 11 : i64} {
  func.func @_focal_loss_tile_kernel(%arg0: i32, %arg1: memref<8x128xf32, #tpu.memory_space<vmem>>, %arg2: memref<8x128xf32, #tpu.memory_space<vmem>>, %arg3: memref<8x128xf32, #tpu.memory_space<vmem>>) attributes {dimension_semantics = [#tpu.dimension_semantics<parallel>], iteration_bounds = array<i64: 3>, scalar_prefetch = 0 : i64, scratch_operands = 0 : i64, tpu.core_type = #tpu.core_type<tc>, window_params = [{transform_indices = @transform_0, window_bounds = array<i64: 8, 128>}, {transform_indices = @transform_1, window_bounds = array<i64: 8, 128>}, {transform_indices = @transform_2, window_bounds = array<i64: 8, 128>}]} {
    %c0 = arith.constant 0 : index
    %c0_0 = arith.constant 0 : index
    %0 = vector.load %arg1[%c0, %c0_0] : memref<8x128xf32, #tpu.memory_space<vmem>>, vector<8x128xf32>
    %c0_1 = arith.constant 0 : index
    %c0_2 = arith.constant 0 : index
    %1 = vector.load %arg2[%c0_1, %c0_2] : memref<8x128xf32, #tpu.memory_space<vmem>>, vector<8x128xf32>
    %2 = arith.mulf %0, %1 : vector<8x128xf32>
    %cst = arith.constant 0.000000e+00 : f32
    %3 = vector.broadcast %cst : f32 to vector<8x128xf32>
    %4 = arith.maximumf %0, %3 : vector<8x128xf32>
    %5 = arith.subf %4, %2 : vector<8x128xf32>
    %6 = math.absf %0 : vector<8x128xf32>
    %cst_3 = arith.constant 0.000000e+00 : f32
    %7 = vector.broadcast %cst_3 : f32 to vector<8x128xf32>
    %8 = arith.subf %7, %6 : vector<8x128xf32>
    %9 = math.exp %8 : vector<8x128xf32>
    %10 = math.log1p %9 : vector<8x128xf32>
    %11 = arith.addf %5, %10 : vector<8x128xf32>
    %12 = arith.addf %0, %1 : vector<8x128xf32>
    %cst_4 = arith.constant 2.000000e+00 : f32
    %13 = vector.broadcast %cst_4 : f32 to vector<8x128xf32>
    %14 = arith.mulf %13, %2 : vector<8x128xf32>
    %15 = arith.subf %12, %14 : vector<8x128xf32>
    %cst_5 = arith.constant 0.899999976 : f32
    %16 = vector.broadcast %cst_5 : f32 to vector<8x128xf32>
    %17 = arith.mulf %16, %1 : vector<8x128xf32>
    %cst_6 = arith.constant 5.000000e-02 : f32
    %18 = vector.broadcast %cst_6 : f32 to vector<8x128xf32>
    %19 = arith.addf %17, %18 : vector<8x128xf32>
    %20 = arith.mulf %19, %11 : vector<8x128xf32>
    %21 = arith.mulf %15, %15 : vector<8x128xf32>
    %22 = arith.mulf %20, %21 : vector<8x128xf32>
    %c8_i32 = arith.constant 8 : i32
    %23 = arith.muli %arg0, %c8_i32 : i32
    %24 = tpu.iota {dimensions = array<i32: 0>} : vector<8x128xi32>
    %25 = vector.broadcast %23 : i32 to vector<8x128xi32>
    %26 = arith.addi %25, %24 : vector<8x128xi32>
    %c20_i32 = arith.constant 20 : i32
    %27 = vector.broadcast %c20_i32 : i32 to vector<8x128xi32>
    %28 = arith.cmpi slt, %26, %27 : vector<8x128xi32>
    %cst_7 = arith.constant 0.000000e+00 : f32
    %29 = vector.broadcast %cst_7 : f32 to vector<8x128xf32>
    %30 = arith.select %28, %22, %29 : vector<8x128xi1>, vector<8x128xf32>
    %31 = vector.shape_cast %30 : vector<8x128xf32> to vector<1x8x128xf32>
    %cst_8 = arith.constant dense<0.000000e+00> : vector<8x128xf32>
    %32 = vector.multi_reduction <add>, %31, %cst_8 [0] : vector<1x8x128xf32> to vector<8x128xf32>
    %c0_9 = arith.constant 0 : index
    %c0_10 = arith.constant 0 : index
    %33 = vector.load %arg3[%c0_9, %c0_10] : memref<8x128xf32, #tpu.memory_space<vmem>>, vector<8x128xf32>
    tpu.vector_store %arg3[%c0_9, %c0_10], %32 {strides = array<i32>} : memref<8x128xf32, #tpu.memory_space<vmem>>, vector<8x128xf32>,
    return
  }
  func.func @transform_0(%arg0: i32) -> (i32, i32) {
    %c0_i32 = arith.constant 0 : i32
    %c0_i32_0 = arith.constant 0 : i32
    return %arg0, %c0_i32 : i32, i32
  }
  func.func @transform_1(%arg0: i32) -> (i32, i32) {
    %c0_i32 = arith.constant 0 : i32
    %c0_i32_0 = arith.constant 0 : i32
    return %arg0, %c0_i32 : i32, i32
  }
  func.func @transform_2(%arg0: i32) -> (i32, i32) {
    %c0_i32 = arith.constant 0 : i32
    %c0_i32_0 = arith.constant 0 : i32
    return %arg0, %c0_i32 : i32, i32
  }
}

</mosaic_0001>

<llo_original>
// kernel: tpu_custom_call.1
$region0: #{tpu_custom_call.1}
  #allocation0 [shape = 'u32[]', space=smem, size = 0x4, offset = 0x4, fixed_abs, tag = 'smem constant byte address 0x4 - core index']
  #allocation1 [shape = 'u32[144,128]{1,0:T(1,128)}', space=vmem, size = 0x12000, scoped, tag = 'internal scratch']
  %s0 = inlined_call_operand.hbm [shape: f32[20,128], index: 0, kind: input, shape index: {}]
  %s1 = inlined_call_operand.hbm [shape: f32[20,128], index: 1, kind: input, shape index: {}]
  %s2 = inlined_call_operand.hbm [shape: f32[24,128], index: 2, kind: output, shape index: {}]
  %s3 = sld [smem:[#allocation0]]
  $region49: #{tpu_custom_call.1} parent=0
    _
  %s5 = ssub.s32 1, %s3
  %s6 = scalar_select 0, %s5, %s3
  $region1: #{tpu_custom_call.1} parent=0
    #allocation2 [shape = 'u8[8192]{0}', space=vmem, size = 0x2000, scoped, tag = 'input window, operand 0']
    #allocation3 [shape = 's32[2]{0}', space=sflag, size = 0x8, scoped, tag = 'scoped memory for tpu_custom_call.1']
    #allocation4 [shape = 's32[2]{0}', space=sflag, size = 0x8, scoped, tag = 'scoped memory for tpu_custom_call.1']
    #allocation5 [shape = 'u8[8192]{0}', space=vmem, size = 0x2000, scoped, tag = 'input window, operand 1']
    #allocation6 [shape = 's32[2]{0}', space=sflag, size = 0x8, scoped, tag = 'scoped memory for tpu_custom_call.1']
    #allocation7 [shape = 'u8[8192]{0}', space=vmem, size = 0x2000, scoped, tag = 'output window, operand 0']
    %7 = vsyncpa [#allocation3], 0
    %s8 = scalar_lea.sflag [#allocation3], 1
    %9 = vsyncpa %s8, 0
    %10 = vsyncpa [#allocation6], 0
    %s11 = scalar_lea.sflag [#allocation6], 1
    %12 = vsyncpa %s11, 0
    %13 = vsyncpa [#allocation4], 0
    %s14 = scalar_lea.sflag [#allocation4], 1
    %15 = vsyncpa %s14, 0
    loop: start=0, step=1, limit=5
    $region2: #{tpu_custom_call.1} parent=1 // loop_pre_header
      _
    $region3: #{tpu_custom_call.1} parent=1 // loop_header
      %s17 = sphi 0, %s21
      %p18 = scmp.ge.s32.totalorder %s17, 5
      %s27 = sphi 0, %s29
      %s30 = sphi 0, %s27
      %s31 = sphi 0, %s30
      %s47 = sphi 0, %s31
      %s53 = sphi 0, %s55
      %s56 = sphi 0, %s53
      %s57 = sphi 0, %s56
      %s73 = sphi 0, %s57
      %s79 = sphi 0, %s81
      %s82 = sphi 0, %s79
      %s83 = sphi 0, %s82
      %s99 = sphi 0, %s83
    $region4: #{tpu_custom_call.1} parent=1 // loop_header_branch
      %20 = sbr.rel (%p18) target = $region8
    $region5: #{tpu_custom_call.1} parent=1 // loop_body
      %s22 = ssub.s32 %s17, 1
      %s23 = ssub.s32 %s17, 2
      %s24 = sadd.s32 %s17, 1
      %s25 = ssub.s32 %s17, %s24
      %p26 = scmp.eq.s32.totalorder %s25, 0
      %s28 = sadd.s32 %s27, 1
      %s29 = scalar_select %p26, %s27, %s28
      %p32 = pneg %p26
      %p33 = scmp.eq.s32.totalorder %s17, 2
      %p34 = por %p32, %p33
      %p35 = scmp.ne.s32.totalorder %s27, %s30
      %p36 = scmp.eq.s32.totalorder %s17, 0
      %p37 = por %p35, %p36
      %p38 = scmp.ne.s32.totalorder %s27, %s30
      %p39 = scmp.eq.s32.totalorder %s22, 2
      %p40 = por %p38, %p39
      %p41 = scmp.ne.s32.totalorder %s30, %s31
      %p42 = scmp.eq.s32.totalorder %s22, 0
      %p43 = por %p41, %p42
      %p44 = scmp.ne.s32.totalorder %s30, %s31
      %p45 = scmp.eq.s32.totalorder %s23, 2
      %p46 = por %p44, %p45
      %p48 = scmp.ne.s32.totalorder %s31, %s47
      %p49 = scmp.eq.s32.totalorder %s23, 0
      %p50 = por %p48, %p49
      %s51 = ssub.s32 %s17, %s24
      %p52 = scmp.eq.s32.totalorder %s51, 0
      %s54 = sadd.s32 %s53, 1
      %s55 = scalar_select %p52, %s53, %s54
      %p58 = pneg %p52
      %p59 = scmp.eq.s32.totalorder %s17, 2
      %p60 = por %p58, %p59
      %p61 = scmp.ne.s32.totalorder %s53, %s56
      %p62 = scmp.eq.s32.totalorder %s17, 0
      %p63 = por %p61, %p62
      %p64 = scmp.ne.s32.totalorder %s53, %s56
      %p65 = scmp.eq.s32.totalorder %s22, 2
      %p66 = por %p64, %p65
      %p67 = scmp.ne.s32.totalorder %s56, %s57
      %p68 = scmp.eq.s32.totalorder %s22, 0
      %p69 = por %p67, %p68
      %p70 = scmp.ne.s32.totalorder %s56, %s57
      %p71 = scmp.eq.s32.totalorder %s23, 2
      %p72 = por %p70, %p71
      %p74 = scmp.ne.s32.totalorder %s57, %s73
      %p75 = scmp.eq.s32.totalorder %s23, 0
      %p76 = por %p74, %p75
      %s77 = ssub.s32 %s17, %s24
      %p78 = scmp.eq.s32.totalorder %s77, 0
      %s80 = sadd.s32 %s79, 1
      %s81 = scalar_select %p78, %s79, %s80
      %p84 = pneg %p78
      %p85 = scmp.eq.s32.totalorder %s17, 2
      %p86 = por %p84, %p85
      %p87 = scmp.ne.s32.totalorder %s79, %s82
      %p88 = scmp.eq.s32.totalorder %s17, 0
      %p89 = por %p87, %p88
      %p90 = scmp.ne.s32.totalorder %s79, %s82
      %p91 = scmp.eq.s32.totalorder %s22, 2
      %p92 = por %p90, %p91
      %p93 = scmp.ne.s32.totalorder %s82, %s83
      %p94 = scmp.eq.s32.totalorder %s22, 0
      %p95 = por %p93, %p94
      %p96 = scmp.ne.s32.totalorder %s82, %s83
      %p97 = scmp.eq.s32.totalorder %s23, 2
      %p98 = por %p96, %p97
      %p100 = scmp.ne.s32.totalorder %s83, %s99
      %p101 = scmp.eq.s32.totalorder %s23, 0
      %p102 = por %p100, %p101
      %p103 = scmp.le.s32.totalorder 1, %s17
      %p104 = scmp.lt.s32.totalorder %s17, 4
      %p105 = pnand %p103, %p104
      %p106 = pneg %p105
      // Predicated region
      $region9: #{tpu_custom_call.1} parent=5 // pred_check
        _
      $region10: #{tpu_custom_call.1} parent=5 // pred_check_branch
        %108 = sbr.rel (%p105) target = $region12
      $region11: #{tpu_custom_call.1} parent=5 // pred_region
        %s109 = ssub.s32 %s17, 1
      $region12: #{tpu_custom_call.1} parent=5 // pred_fallthru
        _
      %p110 = scmp.lt.s32.totalorder %s17, 3
      // Predicated region
      $region13: #{tpu_custom_call.1} parent=5 // pred_check
        %p111 = pneg %p110
      $region14: #{tpu_custom_call.1} parent=5 // pred_check_branch
        %113 = sbr.rel (%p111) target = $region16
      $region15: #{tpu_custom_call.1} parent=5 // pred_region
        // Predicated region
        $region17: #{tpu_custom_call.1} parent=15 // pred_check
          %p114 = pneg %p37
        $region18: #{tpu_custom_call.1} parent=15 // pred_check_branch
          %116 = sbr.rel (%p114) target = $region20
        $region19: #{tpu_custom_call.1} parent=15 // pred_region
          %s117 = sand.u32 %s27, 1
          %s118 = scalar_lea.sflag [#allocation3], %s117
          %s119 = sand.u32 %s27, 1
          %s120 = smul.addr %s119, 8
          %s121 = scalar_lea.vmem [#allocation2], %s120
          %s123 = ssub.s32 128, 128
          %124 = vsyncadd %s118, %s123
          %s125 = smul.addr %s17, 128
          %s126 = scalar_lea.hbm %s0, %s125
          %s128 = sshll.u32 %s121, 4
          %s129 = int_to_ptr.vmem [resolvable:$true] %s128
          %131 = dma.hbm_to_vmem [thread:$0]  %s126, 128, %s129, %s118
        $region20: #{tpu_custom_call.1} parent=15 // pred_fallthru
          _
        // Predicated region
        $region21: #{tpu_custom_call.1} parent=15 // pred_check
          %p132 = pneg %p63
        $region22: #{tpu_custom_call.1} parent=15 // pred_check_branch
          %134 = sbr.rel (%p132) target = $region24
        $region23: #{tpu_custom_call.1} parent=15 // pred_region
          %s135 = sand.u32 %s53, 1
          %s136 = scalar_lea.sflag [#allocation6], %s135
          %s137 = sand.u32 %s53, 1
          %s138 = smul.addr %s137, 8
          %s139 = scalar_lea.vmem [#allocation5], %s138
          %s141 = ssub.s32 128, 128
          %142 = vsyncadd %s136, %s141
          %s143 = smul.addr %s17, 128
          %s144 = scalar_lea.hbm %s1, %s143
          %s146 = sshll.u32 %s139, 4
          %s147 = int_to_ptr.vmem [resolvable:$true] %s146
          %149 = dma.hbm_to_vmem [thread:$0]  %s144, 128, %s147, %s136
        $region24: #{tpu_custom_call.1} parent=15 // pred_fallthru
          _
      $region16: #{tpu_custom_call.1} parent=5 // pred_fallthru
        _
      %p150 = scmp.le.s32.totalorder 1, %s17
      %p151 = scmp.lt.s32.totalorder %s17, 4
      %p152 = pnand %p150, %p151
      %p153 = pneg %p152
      // Predicated region
      $region25: #{tpu_custom_call.1} parent=5 // pred_check
        _
      $region26: #{tpu_custom_call.1} parent=5 // pred_check_branch
        %155 = sbr.rel (%p152) target = $region28
      $region27: #{tpu_custom_call.1} parent=5 // pred_region
        %s156 = ssub.s32 %s17, 1
        %s157 = sand.u32 %s30, 1
        %s158 = scalar_lea.sflag [#allocation3], %s157
        %s159 = sand.u32 %s30, 1
        %s160 = smul.addr %s159, 8
        %s161 = scalar_lea.vmem [#allocation2], %s160
        // Predicated region
        $region29: #{tpu_custom_call.1} parent=27 // pred_check
          %p162 = pneg %p43
        $region30: #{tpu_custom_call.1} parent=27 // pred_check_branch
          %164 = sbr.rel (%p162) target = $region32
        $region31: #{tpu_custom_call.1} parent=27 // pred_region
          %165 = dma.done %s158, 128
        $region32: #{tpu_custom_call.1} parent=27 // pred_fallthru
          _
        %s166 = sand.u32 %s56, 1
        %s167 = scalar_lea.sflag [#allocation6], %s166
        %s168 = sand.u32 %s56, 1
        %s169 = smul.addr %s168, 8
        %s170 = scalar_lea.vmem [#allocation5], %s169
        // Predicated region
        $region33: #{tpu_custom_call.1} parent=27 // pred_check
          %p171 = pneg %p69
        $region34: #{tpu_custom_call.1} parent=27 // pred_check_branch
          %173 = sbr.rel (%p171) target = $region36
        $region35: #{tpu_custom_call.1} parent=27 // pred_region
          %174 = dma.done %s167, 128
        $region36: #{tpu_custom_call.1} parent=27 // pred_fallthru
          _
        %s175 = sand.u32 %s30, 1
        %s176 = scalar_lea.sflag [#allocation3], %s175
        %s177 = sand.u32 %s30, 1
        %s178 = smul.addr %s177, 8
        %s179 = scalar_lea.vmem [#allocation2], %s178
        %p180 = pneg %p43
        %p181 = pneg %p40
        %s182 = sand.u32 %s56, 1
        %s183 = scalar_lea.sflag [#allocation6], %s182
        %s184 = sand.u32 %s56, 1
        %s185 = smul.addr %s184, 8
        %s186 = scalar_lea.vmem [#allocation5], %s185
        %p187 = pneg %p69
        %p188 = pneg %p66
        %p189 = pneg %p95
        %p190 = pneg %p92
        %s191 = sand.u32 %s82, 1
        %s192 = scalar_lea.sflag [#allocation4], %s191
        %s193 = sand.u32 %s82, 1
        %s194 = smul.addr %s193, 8
        %s195 = scalar_lea.vmem [#allocation7], %s194
        %v196 = vld [vmem:[%s161] sm:$0xff]
        %v197 = vld [vmem:[%s170] sm:$0xff]
        %v198 = vmul.f32 %v196, %v197
        %v199 = vmax.f32 %v196, 0.0
        %v200 = vsub.f32 %v199, %v198
        %v201 = vand.u32 2147483647, %v196
        %v202 = vsub.f32 0.0, %v201
        %v203 = vmul.f32 %v202, 1.442695
        %v204 = vpow.pop %v203
        %v205 = vadd.f32 %v204, 1.0
        %v206 = vlog2.pop %v205
        %v207 = vmul.f32 %v206, 0.6931472
        %v208 = vmul.f32 -0.5, %v204
        %v209 = vadd.f32 %v208, 1.0
        %v210 = vmul.f32 %v209, %v204
        %v211 = vand.u32 2147483647, %v204
        %vm212 = vcmp.lt.f32.partialorder %v211, 0.0004427343
        %v213 = vsel %vm212, %v210, %v207
        %v214 = vadd.f32 %v200, %v213
        %v215 = vadd.f32 %v196, %v197
        %v216 = vmul.f32 %v198, 2.0
        %v217 = vsub.f32 %v215, %v216
        %v218 = vmul.f32 %v197, 0.9
        %v219 = vadd.f32 %v218, 0.05
        %v220 = vmul.f32 %v219, %v214
        %v221 = vmul.f32 %v217, %v217
        %v222 = vmul.f32 %v220, %v221
        %s223 = smul.u32 %s22, 8
        %v224 = vlaneseq
        %v225 = vshrl.u32 %v224, 7
        %v226 = vstv %s223
        %v227 = vadd.s32 %v226, %v225
        %vm228 = vcmp.lt.s32.totalorder %v227, 20
        %v229 = vsel %vm228, %v222, 0.0
        %v230 = vadd.f32 %v229, 0.0
        %231 = vst [vmem:[%s195] sm:$0xff] %v230
        %s232 = sand.u32 %s82, 1
        %s233 = scalar_lea.sflag [#allocation4], %s232
        %s234 = sand.u32 %s82, 1
        %s235 = smul.addr %s234, 8
        %s236 = scalar_lea.vmem [#allocation7], %s235
        // Predicated region
        $region37: #{tpu_custom_call.1} parent=27 // pred_check
          %p237 = pneg %p92
        $region38: #{tpu_custom_call.1} parent=27 // pred_check_branch
          %239 = sbr.rel (%p237) target = $region40
        $region39: #{tpu_custom_call.1} parent=27 // pred_region
          %s241 = ssub.s32 128, 128
          %242 = vsyncadd %s233, %s241
          %s243 = smul.addr %s22, 128
          %s244 = scalar_lea.hbm %s2, %s243
          %s246 = sshll.u32 %s236, 4
          %s247 = int_to_ptr.vmem [resolvable:$true] %s246
          %249 = dma.vmem_to_hbm [thread:$0]  %s247, 128, %s244, %s233
        $region40: #{tpu_custom_call.1} parent=27 // pred_fallthru
          _
      $region28: #{tpu_custom_call.1} parent=5 // pred_fallthru
        _
      %p250 = scmp.le.s32.totalorder 2, %s17
      // Predicated region
      $region41: #{tpu_custom_call.1} parent=5 // pred_check
        %p251 = pneg %p250
      $region42: #{tpu_custom_call.1} parent=5 // pred_check_branch
        %253 = sbr.rel (%p251) target = $region44
      $region43: #{tpu_custom_call.1} parent=5 // pred_region
        %s254 = ssub.s32 %s17, 2
        // Predicated region
        $region45: #{tpu_custom_call.1} parent=43 // pred_check
          %p255 = pneg %p98
        $region46: #{tpu_custom_call.1} parent=43 // pred_check_branch
          %257 = sbr.rel (%p255) target = $region48
        $region47: #{tpu_custom_call.1} parent=43 // pred_region
          %s258 = sand.u32 %s83, 1
          %s259 = scalar_lea.sflag [#allocation4], %s258
          %s260 = sand.u32 %s83, 1
          %s261 = smul.addr %s260, 8
          %s262 = scalar_lea.vmem [#allocation7], %s261
          %263 = dma.done %s259, 128
        $region48: #{tpu_custom_call.1} parent=43 // pred_fallthru
          _
      $region44: #{tpu_custom_call.1} parent=5 // pred_fallthru
        _
    $region6: #{tpu_custom_call.1} parent=1 // loop_footer
      %s21 = sadd.s32 1, %s17
    $region7: #{tpu_custom_call.1} parent=1 // loop_footer_branch
      %16 = sbr.rel target = $region3
    $region8: #{tpu_custom_call.1} parent=1 // loop_exit
      _
    %264 = vsyncpa [#allocation3], 1
    %s265 = scalar_lea.sflag [#allocation3], 1
    %266 = vsyncpa %s265, 1
    %267 = vsyncpa [#allocation6], 1
    %s268 = scalar_lea.sflag [#allocation6], 1
    %269 = vsyncpa %s268, 1
    %270 = vsyncpa [#allocation4], 1
    %s271 = scalar_lea.sflag [#allocation4], 1
    %272 = vsyncpa %s271, 1

</llo_original>
